<compile_context>
chip_gen: v7x
topology: tpu7x:2x2x1
jax: 0.10.0
libtpu: 0.0.40
codegen_flags: <defaults>
</compile_context>

<pallas_src>
import functools

import jax
import jax.numpy as jnp
from jax.experimental import pallas as pl
from jax.experimental.pallas import tpu as pltpu

BN_EPS = 1e-5
BN_BETA = 1e-4      # BatchNorm1d init: weight=1, bias=0.0001
LANE = 128
NEG_INF = -1e30
VMEM_LIMIT = 32 * 1024 * 1024   # well inside v7x's 64 MiB physical VMEM


def _round_up(v, m):
    return (v + m - 1) // m * m


def _pad2(a, rows, cols):
    return jnp.pad(a, ((0, rows - a.shape[0]), (0, cols - a.shape[1])))


def _row_mask(shape, row0, n_real):
    rid = jax.lax.broadcasted_iota(jnp.int32, shape, 0) + row0
    return rid < n_real


def _pack_stats(v):
    """Pack per-tile sum / sum-of-squares into one (1, 8, Hp) lane-dense block."""
    hp = v.shape[1]
    return jnp.concatenate(
        [jnp.sum(v, axis=0, keepdims=True),
         jnp.sum(v * v, axis=0, keepdims=True),
         jnp.zeros((6, hp), jnp.float32)], axis=0)[None]


# --------------------------------------------------------------------------- #
# Kernels
# --------------------------------------------------------------------------- #
def _bn_linear_relu_kernel(n_real, tile_n, need_mask,
                           x_ref, mu_ref, inv_ref, w_ref, h_ref, stats_ref):
    """h = relu(BN(x) @ W_feat)  (conv_feat, gfn=True: no propagation, no bias).

    Emits packed partial BN stats of h for the next layer's two-pass BN."""
    i = pl.program_id(0)
    xb = (x_ref[...] - mu_ref[...]) * inv_ref[...] + BN_BETA
    h = jnp.dot(xb.astype(jnp.bfloat16), w_ref[...],
                preferred_element_type=jnp.float32)
    h = jnp.maximum(h, 0.0)
    if need_mask:
        h = jnp.where(_row_mask(h.shape, i * tile_n, n_real), h, 0.0)
    h_ref[...] = h.astype(h_ref.dtype)          # store bf16; stats stay f32
    stats_ref[...] = _pack_stats(h)


def _gcn_layer_kernel(n_real, tile_n, need_mask, a_scale, with_pool, *refs):
    """y = relu(A_hat @ (BN(h) @ W) + b) over the block-diagonal band of A_hat.

    Grid = (row tiles, band K steps).  A_hat is int8 (dequantized by folding
    `a_scale` into the finalize); `h` is VMEM-resident for the whole kernel and
    the needed column block is sliced with pl.ds driven by the scalar-prefetched
    band limits, so u = BN(h) @ W is computed on the fly (no HBM round trip).
    If `with_pool`, also emits per-row-tile global_add_pool partials."""
    if with_pool:
        (kmin_ref, kmax_ref, a_ref, h_ref, mu_ref, inv_ref, w_ref, b_ref,
         p_ref, y_ref, stats_ref, pool_ref, acc_ref) = refs
    else:
        (kmin_ref, kmax_ref, a_ref, h_ref, mu_ref, inv_ref, w_ref, b_ref,
         y_ref, stats_ref, acc_ref) = refs

    i = pl.program_id(0)
    k = pl.program_id(1)

    @pl.when(k == 0)
    def _():
        acc_ref[...] = jnp.zeros_like(acc_ref)

    @pl.when(kmin_ref[i] + k <= kmax_ref[i])
    def _():
        kblk = jnp.minimum(kmin_ref[i] + k, kmax_ref[i])
        row0 = pl.multiple_of(kblk * tile_n, tile_n)
        hb = h_ref[pl.ds(row0, tile_n), :].astype(jnp.float32)
        ub = (hb - mu_ref[...]) * inv_ref[...] + BN_BETA
        u = jnp.dot(ub.astype(jnp.bfloat16), w_ref[...],
                    preferred_element_type=jnp.float32)
        a_blk = a_ref[...].astype(jnp.float32).astype(jnp.bfloat16)
        acc_ref[...] += jnp.dot(a_blk, u.astype(jnp.bfloat16),
                                preferred_element_type=jnp.float32)

    @pl.when(k == pl.num_programs(1) - 1)
    def _():
        y = jnp.maximum(acc_ref[...] * a_scale + b_ref[...], 0.0)
        if need_mask:
            y = jnp.where(_row_mask(y.shape, i * tile_n, n_real), y, 0.0)
        y_ref[...] = y.astype(y_ref.dtype)       # store bf16
        stats_ref[...] = _pack_stats(y)
        if with_pool:
            # global_add_pool partial for this row tile (summed in XLA).
            pool_ref[...] = jnp.dot(p_ref[...], y.astype(jnp.bfloat16),
                                    preferred_element_type=jnp.float32)[None]


def _head_kernel(g_real, c_real,
                 g_ref, wfc_ref, bfc_ref, wcls_ref, bcls_ref,
                 logp_ref, ro_ref):
    """Graph-level head: BN -> Linear -> ReLU -> BN(readout) -> classifier ->
    log_softmax.  All shapes are tiny ([Gp, 128]); padded graph rows / class
    columns are masked out of the statistics / softmax."""
    f32 = jnp.float32
    g = g_ref[...]
    rmask = jax.lax.broadcasted_iota(jnp.int32, g.shape, 0) < g_real
    inv_n = 1.0 / g_real

    def bn(v):
        vm = jnp.where(rmask, v, 0.0)
        mu = jnp.sum(vm, axis=0, keepdims=True) * inv_n
        var = jnp.maximum(
            jnp.sum(vm * vm, axis=0, keepdims=True) * inv_n - mu * mu, 0.0)
        return (v - mu) * jax.lax.rsqrt(var + BN_EPS) + BN_BETA

    gb = bn(g)                                               # bns_fc[0]
    h1 = jnp.dot(gb.astype(jnp.bfloat16), wfc_ref[...],
                 preferred_element_type=f32) + bfc_ref[...]
    h1 = jnp.maximum(h1, 0.0)                                # lins[0] + ReLU
    ro = bn(h1)                                              # bn_hidden
    ro_ref[...] = ro

    logits = jnp.dot(ro.astype(jnp.bfloat16), wcls_ref[...],
                     preferred_element_type=f32) + bcls_ref[...]
    cmask = jax.lax.broadcasted_iota(jnp.int32, logits.shape, 1) < c_real
    logits = jnp.where(cmask, logits, NEG_INF)               # mask padded classes
    m = jnp.max(logits, axis=-1, keepdims=True)
    z = logits - m
    logp_ref[...] = z - jnp.log(jnp.sum(jnp.exp(z), axis=-1, keepdims=True))


# --------------------------------------------------------------------------- #
# Wrapper
# --------------------------------------------------------------------------- #
def _bn_stats_from_packed(stats, n):
    """Finalize cross-tile BN statistics from the packed (T, 8, Hp) partials.

    Note: E[x^2]-E[x]^2 in f32 can cancel for very large N (Welford TODO)."""
    s = jnp.sum(stats[:, 0, :], axis=0, keepdims=True)
    ss = jnp.sum(stats[:, 1, :], axis=0, keepdims=True)
    mu = s / n
    var = jnp.maximum(ss / n - mu * mu, 0.0)
    return mu, jax.lax.rsqrt(var + BN_EPS)


def resgcn_forward(x, a_hat, pool, batch, params, num_conv_layers=3,
                   tile_n=256, quantize_a=True):
    """ResGCN forward (forward_BNConvReLU, default config).

    tile_n: node row/column tile.  256 is a good default on v5e/v6e/v7x; it
    also sets the A-band granularity, so avoid making it much larger than a
    typical graph.  Graphs must be node-contiguous (PyG batching) and `batch`
    must be concrete (band limits / A scale are computed on the host)."""
    f32, bf16 = jnp.float32, jnp.bfloat16
    N, F = x.shape
    G = pool.shape[0]
    H = params["w_feat"].shape[1]
    C = params["w_cls"].shape[1]
    L = num_conv_layers

    Np = _round_up(N, tile_n)
    Fp = _round_up(F, LANE)
    Hp = _round_up(H, LANE)
    Cp = _round_up(C, LANE)
    Gp = _round_up(G, 8)
    T = Np // tile_n
    need_mask = (Np != N)

    # ---- pad to lane/tile-aligned shapes (inert padding) --------------------
    xp = _pad2(x.astype(f32), Np, Fp)
    pp = _pad2(pool.astype(f32), Gp, Np).astype(bf16)
    w_feat = _pad2(params["w_feat"], Fp, Hp).astype(bf16)
    w_conv = [_pad2(params["w_conv"][i], Hp, Hp).astype(bf16) for i in range(L)]
    b_conv = [_pad2(params["b_conv"][i], 1, Hp).astype(f32) for i in range(L)]
    w_fc = _pad2(params["w_fc"], Hp, Hp).astype(bf16)
    b_fc = _pad2(params["b_fc"], 1, Hp).astype(f32)
    w_cls = _pad2(params["w_cls"], Hp, Cp).astype(bf16)
    b_cls = _pad2(params["b_cls"], 1, Cp).astype(f32)

    # ---- A_hat: int8 + single scale (halves the dominant HBM stream) --------
    if quantize_a:
        a_scale = max(float(jnp.max(jnp.abs(a_hat))) / 127.0, 1e-30)
        ap = jnp.clip(jnp.round(a_hat.astype(f32) / a_scale), -127.0, 127.0)
        ap = _pad2(ap, Np, Np).astype(jnp.int8)
        a_bytes = 1
    else:
        a_scale = 1.0
        ap = _pad2(a_hat.astype(f32), Np, Np).astype(bf16)
        a_bytes = 2

    # ---- per-row-tile column band of the block-diagonal A_hat ---------------
    counts = jnp.sum(batch[None, :] == jnp.arange(G)[:, None], axis=1)
    ends = jnp.cumsum(counts)
    starts = ends - counts
    blk = jnp.arange(T)
    lo = jnp.minimum(blk * tile_n, N - 1)
    hi = jnp.minimum(blk * tile_n + tile_n - 1, N - 1)
    kmin = (starts[batch[lo]] // tile_n).astype(jnp.int32)
    kmax = ((ends[batch[hi]] - 1) // tile_n).astype(jnp.int32)
    # Static band-K grid extent (batch is concrete here; not under jit).
    k_extent = int(jnp.max(kmax - kmin)) + 1

    row_cp = pltpu.CompilerParams(dimension_semantics=("parallel",),
                                  vmem_limit_bytes=VMEM_LIMIT)
    adj_cp = pltpu.CompilerParams(dimension_semantics=("parallel", "arbitrary"),
                                  vmem_limit_bytes=VMEM_LIMIT)
    adj_cost = pl.CostEstimate(
        flops=2 * T * k_extent * (tile_n * tile_n * Hp + tile_n * Hp * Hp),
        transcendentals=0,
        bytes_accessed=T * k_extent * tile_n * tile_n * a_bytes
        + 4 * Np * Hp + Hp * Hp * 2 + Gp * Np * 2)

    stats_shape = jax.ShapeDtypeStruct((T, 8, Hp), f32)

    # ---- bn_feat statistics of the raw input (tiny, done in XLA) ------------
    xf = x.astype(f32)
    mu0 = jnp.mean(xf, axis=0, keepdims=True)
    var0 = jnp.maximum(jnp.mean(xf * xf, axis=0, keepdims=True) - mu0 * mu0, 0.0)
    mu = _pad2(mu0, 1, Fp)
    inv = _pad2(jax.lax.rsqrt(var0 + BN_EPS), 1, Fp)

    # ---- bn_feat + conv_feat (gfn=True) + ReLU ------------------------------
    h, stats = pl.pallas_call(
        functools.partial(_bn_linear_relu_kernel, N, tile_n, need_mask),
        grid=(T,),
        in_specs=[pl.BlockSpec((tile_n, Fp), lambda i: (i, 0)),
                  pl.BlockSpec((1, Fp), lambda i: (0, 0)),
                  pl.BlockSpec((1, Fp), lambda i: (0, 0)),
                  pl.BlockSpec((Fp, Hp), lambda i: (0, 0))],
        out_specs=(pl.BlockSpec((tile_n, Hp), lambda i: (i, 0)),
                   pl.BlockSpec((1, 8, Hp), lambda i: (i, 0, 0))),
        out_shape=(jax.ShapeDtypeStruct((Np, Hp), bf16), stats_shape),
        compiler_params=row_cp,
    )(xp, mu, inv, w_feat)

    # ---- GCN blocks (fused BN @ W + banded A_hat matmul + bias + ReLU) ------
    pool_parts = None
    for layer in range(L):
        mu, inv = _bn_stats_from_packed(stats, N)
        with_pool = (layer == L - 1)

        in_specs = [
            pl.BlockSpec((tile_n, tile_n),
                         lambda i, k, kmn, kmx:
                         (i, jnp.minimum(kmn[i] + k, kmx[i]))),
            pl.BlockSpec((Np, Hp), lambda i, k, kmn, kmx: (0, 0)),  # resident h
            pl.BlockSpec((1, Hp), lambda i, k, kmn, kmx: (0, 0)),
            pl.BlockSpec((1, Hp), lambda i, k, kmn, kmx: (0, 0)),
            pl.BlockSpec((Hp, Hp), lambda i, k, kmn, kmx: (0, 0)),
            pl.BlockSpec((1, Hp), lambda i, k, kmn, kmx: (0, 0)),
        ]
        out_specs = [
            pl.BlockSpec((tile_n, Hp), lambda i, k, kmn, kmx: (i, 0)),
            pl.BlockSpec((1, 8, Hp), lambda i, k, kmn, kmx: (i, 0, 0)),
        ]
        out_shape = [jax.ShapeDtypeStruct((Np, Hp), bf16), stats_shape]
        args = [kmin, kmax, ap, h, mu, inv, w_conv[layer], b_conv[layer]]
        if with_pool:
            in_specs.append(pl.BlockSpec((Gp, tile_n),
                                         lambda i, k, kmn, kmx: (0, i)))
            out_specs.append(pl.BlockSpec((1, Gp, Hp),
                                          lambda i, k, kmn, kmx: (i, 0, 0)))
            out_shape.append(jax.ShapeDtypeStruct((T, Gp, Hp), f32))
            args.append(pp)

        outs = pl.pallas_call(
            functools.partial(_gcn_layer_kernel, N, tile_n, need_mask,
                              a_scale, with_pool),
            grid_spec=pltpu.PrefetchScalarGridSpec(
                num_scalar_prefetch=2,
                grid=(T, k_extent),
                in_specs=in_specs,
                out_specs=tuple(out_specs),
                scratch_shapes=[pltpu.VMEM((tile_n, Hp), f32)]),
            out_shape=tuple(out_shape),
            compiler_params=adj_cp,
            cost_estimate=adj_cost,
        )(*args)
        if with_pool:
            h, stats, pool_parts = outs
        else:
            h, stats = outs

    # ---- global_add_pool finalize (sum the per-row-tile partials) -----------
    g = jnp.sum(pool_parts, axis=0)                           # (Gp, Hp) f32

    # ---- graph-level head ----------------------------------------------------
    vm = pl.BlockSpec(memory_space=pltpu.MemorySpace.VMEM)
    logp_pad, ro_pad = pl.pallas_call(
        functools.partial(_head_kernel, G, C),
        in_specs=[vm] * 5,
        out_specs=(vm, vm),
        out_shape=(jax.ShapeDtypeStruct((Gp, Cp), f32),
                   jax.ShapeDtypeStruct((Gp, Hp), f32)),
    )(g, w_fc, b_fc, w_cls, b_cls)

    return logp_pad[:G, :C], ro_pad[:G, :H]


# --------------------------------------------------------------------------- #
# Example inputs / parameters
# --------------------------------------------------------------------------- #
def build_graph(key, num_nodes, num_graphs, edges_per_graph):
    """Random undirected edges within each graph; returns (A_hat, pool, batch)."""
    nodes_per_graph = num_nodes // num_graphs
    batch = jnp.repeat(jnp.arange(num_graphs), nodes_per_graph)

    adj = jnp.zeros((num_nodes, num_nodes), jnp.float32)
    for g in range(num_graphs):
        key, k1, k2 = jax.random.split(key, 3)
        lo = g * nodes_per_graph
        src = jax.random.randint(k1, (edges_per_graph,), lo, lo + nodes_per_graph)
        dst = jax.random.randint(k2, (edges_per_graph,), lo, lo + nodes_per_graph)
        adj = adj.at[src, dst].set(1.0)
    adj = jnp.maximum(adj, adj.T)                       # undirected
    adj = jnp.maximum(adj, jnp.eye(num_nodes))          # self loops (weight 1)
    deg = jnp.sum(adj, axis=1)
    dinv = jax.lax.rsqrt(deg)
    a_hat = dinv[:, None] * adj * dinv[None, :]         # D^-1/2 (A+I) D^-1/2

    pool = (batch[None, :] == jnp.arange(num_graphs)[:, None]).astype(jnp.float32)
    return a_hat, pool, batch


def init_params(key, num_features, hidden, num_classes, num_conv_layers=3):
    ks = jax.random.split(key, 8)
    s = 0.1
    return {
        "w_feat": s * jax.random.normal(ks[0], (num_features, hidden), jnp.float32),
        "w_conv": s * jax.random.normal(ks[1], (num_conv_layers, hidden, hidden), jnp.float32),
        "b_conv": s * jax.random.normal(ks[2], (num_conv_layers, 1, hidden), jnp.float32),
        "w_fc":   s * jax.random.normal(ks[3], (hidden, hidden), jnp.float32),
        "b_fc":   s * jax.random.normal(ks[4], (1, hidden), jnp.float32),
        "w_cls":  s * jax.random.normal(ks[5], (hidden, num_classes), jnp.float32),
        "b_cls":  s * jax.random.normal(ks[6], (1, num_classes), jnp.float32),
    }
    # TODO(synk): gating / xg / collapse / other res_branch variants of ResGCN
    # are not exercised by the default config and are not implemented here.


if __name__ == "__main__":
    key = jax.random.PRNGKey(0)
    k_graph, k_x, k_p = jax.random.split(key, 3)

    NUM_NODES = 320       # total nodes across all graphs
    NUM_GRAPHS = 5        # graphs in the batch (64 nodes each)
    NUM_FEATURES = 16     # dataset.num_features
    HIDDEN = 32
    NUM_CLASSES = 4       # dataset.num_classes
    NUM_CONV_LAYERS = 3

    a_hat, pool, batch = build_graph(k_graph, NUM_NODES, NUM_GRAPHS,
                                     edges_per_graph=200)
    x = jax.random.normal(k_x, (NUM_NODES, NUM_FEATURES), jnp.float32)
    params = init_params(k_p, NUM_FEATURES, HIDDEN, NUM_CLASSES, NUM_CONV_LAYERS)

    # tile_n=256 is a good default across v5e/v6e/v7x (per-step overhead is
    # amortized and the band granularity still skips cross-graph zero blocks).
    log_probs, readout = resgcn_forward(x, a_hat, pool, batch, params,
                                        num_conv_layers=NUM_CONV_LAYERS,
                                        tile_n=256, quantize_a=True)
    jax.block_until_ready((log_probs, readout))

    assert log_probs.shape == (NUM_GRAPHS, NUM_CLASSES)
    assert readout.shape == (NUM_GRAPHS, HIDDEN)
    assert bool(jnp.all(jnp.isfinite(log_probs)))
    assert bool(jnp.all(jnp.isfinite(readout)))
    # log_softmax rows must exponentiate to ~1.
    assert bool(jnp.all(jnp.abs(jnp.sum(jnp.exp(log_probs), axis=-1) - 1.0) < 1e-3))
    print("KERNEL_OK")
</pallas_src>

<mosaic_0001>
module attributes {stable_mosaic.version = 11 : i64} {
  func.func @_bn_linear_relu_kernel(%arg0: i32, %arg1: memref<256x128xf32, #tpu.memory_space<vmem>>, %arg2: memref<1x128xf32, #tpu.memory_space<vmem>>, %arg3: memref<1x128xf32, #tpu.memory_space<vmem>>, %arg4: memref<128x128xbf16, #tpu.memory_space<vmem>>, %arg5: memref<256x128xbf16, #tpu.memory_space<vmem>>, %arg6: memref<1x8x128xf32, #tpu.memory_space<vmem>>) attributes {dimension_semantics = [#tpu.dimension_semantics<parallel>], iteration_bounds = array<i64: 2>, scalar_prefetch = 0 : i64, scratch_operands = 0 : i64, tpu.core_type = #tpu.core_type<tc>, window_params = [{transform_indices = @transform_0, window_bounds = array<i64: 256, 128>}, {pipeline_mode = #tpu.pipeline_mode<synchronous>, transform_indices = @transform_1, window_bounds = array<i64: 1, 128>}, {pipeline_mode = #tpu.pipeline_mode<synchronous>, transform_indices = @transform_2, window_bounds = array<i64: 1, 128>}, {pipeline_mode = #tpu.pipeline_mode<synchronous>, transform_indices = @transform_3, window_bounds = array<i64: 128, 128>}, {transform_indices = @transform_4, window_bounds = array<i64: 256, 128>}, {transform_indices = @transform_5, window_bounds = array<i64: 1, 8, 128>}]} {
    %c0 = arith.constant 0 : index
    %c0_0 = arith.constant 0 : index
    %0 = vector.load %arg1[%c0, %c0_0] : memref<256x128xf32, #tpu.memory_space<vmem>>, vector<256x128xf32>
    %c0_1 = arith.constant 0 : index
    %c0_2 = arith.constant 0 : index
    %1 = vector.load %arg2[%c0_1, %c0_2] : memref<1x128xf32, #tpu.memory_space<vmem>>, vector<1x128xf32>
    %2 = vector.broadcast %1 : vector<1x128xf32> to vector<256x128xf32>
    %3 = arith.subf %0, %2 : vector<256x128xf32>
    %c0_3 = arith.constant 0 : index
    %c0_4 = arith.constant 0 : index
    %4 = vector.load %arg3[%c0_3, %c0_4] : memref<1x128xf32, #tpu.memory_space<vmem>>, vector<1x128xf32>
    %5 = vector.broadcast %4 : vector<1x128xf32> to vector<256x128xf32>
    %6 = arith.mulf %3, %5 : vector<256x128xf32>
    %cst = arith.constant 9.99999974E-5 : f32
    %7 = vector.broadcast %cst : f32 to vector<256x128xf32>
    %8 = arith.addf %6, %7 : vector<256x128xf32>
    %9 = arith.truncf %8 : vector<256x128xf32> to vector<256x128xbf16>
    %c0_5 = arith.constant 0 : index
    %c0_6 = arith.constant 0 : index
    %10 = vector.load %arg4[%c0_5, %c0_6] : memref<128x128xbf16, #tpu.memory_space<vmem>>, vector<128x128xbf16>
    %cst_7 = arith.constant dense<0.000000e+00> : vector<256x128xf32>
    %11 = tpu.matmul %9, %10, %cst_7 {dimension_numbers = #tpu.dot_dimension_numbers<[1], [0], [0], [1], [0, 0, 1, 1], [], []>} : vector<256x128xbf16>, vector<128x128xbf16>, vector<256x128xf32> -> vector<256x128xf32>
    %cst_8 = arith.constant 0.000000e+00 : f32
    %12 = vector.broadcast %cst_8 : f32 to vector<256x128xf32>
    %13 = arith.maximumf %11, %12 : vector<256x128xf32>
    %c256_i32 = arith.constant 256 : i32
    %14 = arith.muli %arg0, %c256_i32 : i32
    %15 = tpu.iota {dimensions = array<i32: 0>} : vector<256x128xi32>
    %16 = vector.broadcast %14 : i32 to vector<256x128xi32>
    %17 = arith.addi %15, %16 : vector<256x128xi32>
    %c320_i32 = arith.constant 320 : i32
    %18 = vector.broadcast %c320_i32 : i32 to vector<256x128xi32>
    %19 = arith.cmpi slt, %17, %18 : vector<256x128xi32>
    %cst_9 = arith.constant 0.000000e+00 : f32
    %20 = vector.broadcast %cst_9 : f32 to vector<256x128xf32>
    %21 = arith.select %19, %13, %20 : vector<256x128xi1>, vector<256x128xf32>
    %22 = arith.truncf %21 : vector<256x128xf32> to vector<256x128xbf16>
    %c0_10 = arith.constant 0 : index
    %c0_11 = arith.constant 0 : index
    %23 = vector.load %arg5[%c0_10, %c0_11] : memref<256x128xbf16, #tpu.memory_space<vmem>>, vector<256x128xbf16>
    tpu.vector_store %arg5[%c0_10, %c0_11], %22 {strides = array<i32>} : memref<256x128xbf16, #tpu.memory_space<vmem>>, vector<256x128xbf16>,
    %cst_12 = arith.constant dense<0.000000e+00> : vector<128xf32>
    %24 = vector.multi_reduction <add>, %21, %cst_12 [0] : vector<256x128xf32> to vector<128xf32>
    %25 = vector.shape_cast %24 : vector<128xf32> to vector<1x128xf32>
    %26 = arith.mulf %21, %21 : vector<256x128xf32>
    %cst_13 = arith.constant dense<0.000000e+00> : vector<128xf32>
    %27 = vector.multi_reduction <add>, %26, %cst_13 [0] : vector<256x128xf32> to vector<128xf32>
    %28 = vector.shape_cast %27 : vector<128xf32> to vector<1x128xf32>
    %cst_14 = arith.constant 0.000000e+00 : f32
    %29 = vector.broadcast %cst_14 : f32 to vector<6x128xf32>
    %30 = tpu.concatenate %25, %28, %29 in 0 : vector<1x128xf32>, vector<1x128xf32>, vector<6x128xf32> -> vector<8x128xf32>
    %31 = vector.shape_cast %30 : vector<8x128xf32> to vector<1x8x128xf32>
    %c0_15 = arith.constant 0 : index
    %c0_16 = arith.constant 0 : index
    %c0_17 = arith.constant 0 : index
    %32 = vector.load %arg6[%c0_15, %c0_16, %c0_17] : memref<1x8x128xf32, #tpu.memory_space<vmem>>, vector<1x8x128xf32>
    tpu.vector_store %arg6[%c0_15, %c0_16, %c0_17], %31 {strides = array<i32>} : memref<1x8x128xf32, #tpu.memory_space<vmem>>, vector<1x8x128xf32>,
    return
  }
  func.func @transform_0(%arg0: i32) -> (i32, i32) {
    %c0_i32 = arith.constant 0 : i32
    %c0_i32_0 = arith.constant 0 : i32
    return %arg0, %c0_i32 : i32, i32
  }
  func.func @transform_1(%arg0: i32) -> (i32, i32) {
    %c0_i32 = arith.constant 0 : i32
    %c0_i32_0 = arith.constant 0 : i32
    %c0_i32_1 = arith.constant 0 : i32
    return %c0_i32, %c0_i32_0 : i32, i32
  }
  func.func @transform_2(%arg0: i32) -> (i32, i32) {
    %c0_i32 = arith.constant 0 : i32
    %c0_i32_0 = arith.constant 0 : i32
    %c0_i32_1 = arith.constant 0 : i32
    return %c0_i32, %c0_i32_0 : i32, i32
  }
  func.func @transform_3(%arg0: i32) -> (i32, i32) {
    %c0_i32 = arith.constant 0 : i32
    %c0_i32_0 = arith.constant 0 : i32
    %c0_i32_1 = arith.constant 0 : i32
    return %c0_i32, %c0_i32_0 : i32, i32
  }
  func.func @transform_4(%arg0: i32) -> (i32, i32) {
    %c0_i32 = arith.constant 0 : i32
    %c0_i32_0 = arith.constant 0 : i32
    return %arg0, %c0_i32 : i32, i32
  }
  func.func @transform_5(%arg0: i32) -> (i32, i32, i32) {
    %c0_i32 = arith.constant 0 : i32
    %c0_i32_0 = arith.constant 0 : i32
    %c0_i32_1 = arith.constant 0 : i32
    return %arg0, %c0_i32, %c0_i32_0 : i32, i32, i32
  }
}

</mosaic_0001>

<llo_original>
// kernel: tpu_custom_call.1
$region0: #{tpu_custom_call.1}
  #allocation0 [shape = 'u32[]', space=smem, size = 0x4, offset = 0x4, fixed_abs, tag = 'smem constant byte address 0x4 - core index']
  #allocation1 [shape = 'u32[144,128]{1,0:T(1,128)}', space=vmem, size = 0x12000, scoped, tag = 'internal scratch']
  %s0 = inlined_call_operand.hbm [shape: f32[512,128], index: 0, kind: input, shape index: {}]
  %s1 = inlined_call_operand.vmem [shape: f32[1,128], index: 1, kind: input, shape index: {}]
  %s2 = inlined_call_operand.vmem [shape: f32[1,128], index: 2, kind: input, shape index: {}]
  %s3 = inlined_call_operand.hbm [shape: bf16[128,128], index: 3, kind: input, shape index: {}]
  %s4 = inlined_call_operand.hbm [shape: bf16[512,128], index: 4, kind: output, shape index: {0}]
  %s5 = inlined_call_operand.hbm [shape: f32[2,8,128], index: 5, kind: output, shape index: {1}]
  %6 = xla_tuple %s4, %s5
  %s7 = sld [smem:[#allocation0]]
  $region65: #{tpu_custom_call.1} parent=0
    _
  %s9 = ssub.s32 1, %s7
  %s10 = scalar_select 0, %s9, %s7
  $region1: #{tpu_custom_call.1} parent=0
    #allocation2 [shape = 'u8[262144]{0}', space=vmem, size = 0x40000, scoped, tag = 'input window, operand 0']
    #allocation3 [shape = 's32[2]{0}', space=sflag, size = 0x8, scoped, tag = 'scoped memory for tpu_custom_call.1']
    #allocation4 [shape = 's32[2]{0}', space=sflag, size = 0x8, scoped, tag = 'scoped memory for tpu_custom_call.1']
    #allocation5 [shape = 'u8[32768]{0}', space=vmem, size = 0x8000, scoped, tag = 'input window, operand 3, single buffered']
    #allocation6 [shape = 's32[1]{0}', space=sflag, size = 0x4, scoped, tag = 'scoped memory for tpu_custom_call.1']
    #allocation7 [shape = 'u8[131072]{0}', space=vmem, size = 0x20000, scoped, tag = 'output window, operand 0']
    #allocation8 [shape = 'u8[8192]{0}', space=vmem, size = 0x2000, scoped, tag = 'output window, operand 1']
    #allocation9 [shape = 's32[2]{0}', space=sflag, size = 0x8, scoped, tag = 'scoped memory for tpu_custom_call.1']
    %11 = vsyncpa [#allocation3], 0
    %s12 = scalar_lea.sflag [#allocation3], 1
    %13 = vsyncpa %s12, 0
    %14 = vsyncpa [#allocation6], 0
    %15 = vsyncpa [#allocation4], 0
    %s16 = scalar_lea.sflag [#allocation4], 1
    %17 = vsyncpa %s16, 0
    %18 = vsyncpa [#allocation9], 0
    %s19 = scalar_lea.sflag [#allocation9], 1
    %20 = vsyncpa %s19, 0
    loop: start=0, step=1, limit=4
    $region2: #{tpu_custom_call.1} parent=1 // loop_pre_header
      _
    $region3: #{tpu_custom_call.1} parent=1 // loop_header
      %s22 = sphi 0, %s26
      %p23 = scmp.ge.s32.totalorder %s22, 4
      %s32 = sphi 0, %s34
      %s35 = sphi 0, %s32
      %s36 = sphi 0, %s35
      %s52 = sphi 0, %s36
      %s56 = sphi 0, %s56
      %s58 = sphi 0, %s56
      %s59 = sphi 0, %s58
      %s73 = sphi 0, %s59
      %s77 = sphi 0, %s77
      %s79 = sphi 0, %s77
      %s80 = sphi 0, %s79
      %s94 = sphi 0, %s80
      %s98 = sphi 0, %s98
      %s100 = sphi 0, %s98
      %s101 = sphi 0, %s100
      %s115 = sphi 0, %s101
      %s121 = sphi 0, %s123
      %s124 = sphi 0, %s121
      %s125 = sphi 0, %s124
      %s141 = sphi 0, %s125
      %s147 = sphi 0, %s149
      %s150 = sphi 0, %s147
      %s151 = sphi 0, %s150
      %s167 = sphi 0, %s151
    $region4: #{tpu_custom_call.1} parent=1 // loop_header_branch
      %25 = sbr.rel (%p23) target = $region8
    $region5: #{tpu_custom_call.1} parent=1 // loop_body
      %s27 = ssub.s32 %s22, 1
      %s28 = ssub.s32 %s22, 2
      %s29 = sadd.s32 %s22, 1
      %s30 = ssub.s32 %s22, %s29
      %p31 = scmp.eq.s32.totalorder %s30, 0
      %s33 = sadd.s32 %s32, 1
      %s34 = scalar_select %p31, %s32, %s33
      %p37 = pneg %p31
      %p38 = scmp.eq.s32.totalorder %s22, 1
      %p39 = por %p37, %p38
      %p40 = scmp.ne.s32.totalorder %s32, %s35
      %p41 = scmp.eq.s32.totalorder %s22, 0
      %p42 = por %p40, %p41
      %p43 = scmp.ne.s32.totalorder %s32, %s35
      %p44 = scmp.eq.s32.totalorder %s27, 1
      %p45 = por %p43, %p44
      %p46 = scmp.ne.s32.totalorder %s35, %s36
      %p47 = scmp.eq.s32.totalorder %s27, 0
      %p48 = por %p46, %p47
      %p49 = scmp.ne.s32.totalorder %s35, %s36
      %p50 = scmp.eq.s32.totalorder %s28, 1
      %p51 = por %p49, %p50
      %p53 = scmp.ne.s32.totalorder %s36, %s52
      %p54 = scmp.eq.s32.totalorder %s28, 0
      %p55 = por %p53, %p54
      %s57 = sadd.s32 %s56, 1
      %p60 = scmp.eq.s32.totalorder %s22, 1
      %p61 = scmp.ne.s32.totalorder %s56, %s58
      %p62 = scmp.eq.s32.totalorder %s22, 0
      %p63 = por %p61, %p62
      %p64 = scmp.ne.s32.totalorder %s56, %s58
      %p65 = scmp.eq.s32.totalorder %s27, 1
      %p66 = por %p64, %p65
      %p67 = scmp.ne.s32.totalorder %s58, %s59
      %p68 = scmp.eq.s32.totalorder %s27, 0
      %p69 = por %p67, %p68
      %p70 = scmp.ne.s32.totalorder %s58, %s59
      %p71 = scmp.eq.s32.totalorder %s28, 1
      %p72 = por %p70, %p71
      %p74 = scmp.ne.s32.totalorder %s59, %s73
      %p75 = scmp.eq.s32.totalorder %s28, 0
      %p76 = por %p74, %p75
      %s78 = sadd.s32 %s77, 1
      %p81 = scmp.eq.s32.totalorder %s22, 1
      %p82 = scmp.ne.s32.totalorder %s77, %s79
      %p83 = scmp.eq.s32.totalorder %s22, 0
      %p84 = por %p82, %p83
      %p85 = scmp.ne.s32.totalorder %s77, %s79
      %p86 = scmp.eq.s32.totalorder %s27, 1
      %p87 = por %p85, %p86
      %p88 = scmp.ne.s32.totalorder %s79, %s80
      %p89 = scmp.eq.s32.totalorder %s27, 0
      %p90 = por %p88, %p89
      %p91 = scmp.ne.s32.totalorder %s79, %s80
      %p92 = scmp.eq.s32.totalorder %s28, 1
      %p93 = por %p91, %p92
      %p95 = scmp.ne.s32.totalorder %s80, %s94
      %p96 = scmp.eq.s32.totalorder %s28, 0
      %p97 = por %p95, %p96
      %s99 = sadd.s32 %s98, 1
      %p102 = scmp.eq.s32.totalorder %s22, 1
      %p103 = scmp.ne.s32.totalorder %s98, %s100
      %p104 = scmp.eq.s32.totalorder %s22, 0
      %p105 = por %p103, %p104
      %p106 = scmp.ne.s32.totalorder %s98, %s100
      %p107 = scmp.eq.s32.totalorder %s27, 1
      %p108 = por %p106, %p107
      %p109 = scmp.ne.s32.totalorder %s100, %s101
      %p110 = scmp.eq.s32.totalorder %s27, 0
      %p111 = por %p109, %p110
      %p112 = scmp.ne.s32.totalorder %s100, %s101
      %p113 = scmp.eq.s32.totalorder %s28, 1
      %p114 = por %p112, %p113
      %p116 = scmp.ne.s32.totalorder %s101, %s115
      %p117 = scmp.eq.s32.totalorder %s28, 0
      %p118 = por %p116, %p117
      %s119 = ssub.s32 %s22, %s29
      %p120 = scmp.eq.s32.totalorder %s119, 0
      %s122 = sadd.s32 %s121, 1
      %s123 = scalar_select %p120, %s121, %s122
      %p126 = pneg %p120
      %p127 = scmp.eq.s32.totalorder %s22, 1
      %p128 = por %p126, %p127
      %p129 = scmp.ne.s32.totalorder %s121, %s124
      %p130 = scmp.eq.s32.totalorder %s22, 0
      %p131 = por %p129, %p130
      %p132 = scmp.ne.s32.totalorder %s121, %s124
      %p133 = scmp.eq.s32.totalorder %s27, 1
      %p134 = por %p132, %p133
      %p135 = scmp.ne.s32.totalorder %s124, %s125
      %p136 = scmp.eq.s32.totalorder %s27, 0
      %p137 = por %p135, %p136
      %p138 = scmp.ne.s32.totalorder %s124, %s125
      %p139 = scmp.eq.s32.totalorder %s28, 1
      %p140 = por %p138, %p139
      %p142 = scmp.ne.s32.totalorder %s125, %s141
      %p143 = scmp.eq.s32.totalorder %s28, 0
      %p144 = por %p142, %p143
      %s145 = ssub.s32 %s22, %s29
      %p146 = scmp.eq.s32.totalorder %s145, 0
      %s148 = sadd.s32 %s147, 1
      %s149 = scalar_select %p146, %s147, %s148
      %p152 = pneg %p146
      %p153 = scmp.eq.s32.totalorder %s22, 1
      %p154 = por %p152, %p153
      %p155 = scmp.ne.s32.totalorder %s147, %s150
      %p156 = scmp.eq.s32.totalorder %s22, 0
      %p157 = por %p155, %p156
      %p158 = scmp.ne.s32.totalorder %s147, %s150
      %p159 = scmp.eq.s32.totalorder %s27, 1
      %p160 = por %p158, %p159
      %p161 = scmp.ne.s32.totalorder %s150, %s151
      %p162 = scmp.eq.s32.totalorder %s27, 0
      %p163 = por %p161, %p162
      %p164 = scmp.ne.s32.totalorder %s150, %s151
      %p165 = scmp.eq.s32.totalorder %s28, 1
      %p166 = por %p164, %p165
      %p168 = scmp.ne.s32.totalorder %s151, %s167
      %p169 = scmp.eq.s32.totalorder %s28, 0
      %p170 = por %p168, %p169
      %p171 = scmp.le.s32.totalorder 1, %s22
      %p172 = scmp.lt.s32.totalorder %s22, 3
      %p173 = pnand %p171, %p172
      %p174 = pneg %p173
      // Predicated region
      $region9: #{tpu_custom_call.1} parent=5 // pred_check
        _
      $region10: #{tpu_custom_call.1} parent=5 // pred_check_branch
        %176 = sbr.rel (%p173) target = $region12
      $region11: #{tpu_custom_call.1} parent=5 // pred_region
        %s177 = ssub.s32 %s22, 1
        // Predicated region
        $region13: #{tpu_custom_call.1} parent=11 // pred_check
          %p178 = pneg %p69
        $region14: #{tpu_custom_call.1} parent=11 // pred_check_branch
          %180 = sbr.rel (%p178) target = $region16
        $region15: #{tpu_custom_call.1} parent=11 // pred_region
          _
        $region16: #{tpu_custom_call.1} parent=11 // pred_fallthru
          _
        // Predicated region
        $region17: #{tpu_custom_call.1} parent=11 // pred_check
          %p181 = pneg %p90
        $region18: #{tpu_custom_call.1} parent=11 // pred_check_branch
          %183 = sbr.rel (%p181) target = $region20
        $region19: #{tpu_custom_call.1} parent=11 // pred_region
          _
        $region20: #{tpu_custom_call.1} parent=11 // pred_fallthru
          _
        // Predicated region
        $region21: #{tpu_custom_call.1} parent=11 // pred_check
          %p184 = pneg %p111
        $region22: #{tpu_custom_call.1} parent=11 // pred_check_branch
          %186 = sbr.rel (%p184) target = $region24
        $region23: #{tpu_custom_call.1} parent=11 // pred_region
          %s188 = ssub.s32 1024, 1024
          %189 = vsyncadd [#allocation6], %s188
          %s190 = sshll.u32 [#allocation5], 4
          %s191 = int_to_ptr.vmem [resolvable:$true] %s190
          %196 = dma.hbm_to_vmem [thread:$0]  %s3, 1024, %s191, [#allocation6], 64, 64, 4
        $region24: #{tpu_custom_call.1} parent=11 // pred_fallthru
          _
      $region12: #{tpu_custom_call.1} parent=5 // pred_fallthru
        _
      %p197 = scmp.lt.s32.totalorder %s22, 2
      // Predicated region
      $region25: #{tpu_custom_call.1} parent=5 // pred_check
        %p198 = pneg %p197
      $region26: #{tpu_custom_call.1} parent=5 // pred_check_branch
        %200 = sbr.rel (%p198) target = $region28
      $region27: #{tpu_custom_call.1} parent=5 // pred_region
        // Predicated region
        $region29: #{tpu_custom_call.1} parent=27 // pred_check
          %p201 = pneg %p42
        $region30: #{tpu_custom_call.1} parent=27 // pred_check_branch
          %203 = sbr.rel (%p201) target = $region32
        $region31: #{tpu_custom_call.1} parent=27 // pred_region
          %s204 = sand.u32 %s32, 1
          %s205 = scalar_lea.sflag [#allocation3], %s204
          %s206 = sand.u32 %s32, 1
          %s207 = smul.addr %s206, 256
          %s208 = scalar_lea.vmem [#allocation2], %s207
          %s209 = smul.u32 32, %s22
          %s211 = ssub.s32 4096, 4096
          %212 = vsyncadd %s205, %s211
          %s213 = smul.addr %s209, 128
          %s214 = scalar_lea.hbm %s0, %s213
          %s215 = sshll.u32 %s208, 4
          %s216 = int_to_ptr.vmem [resolvable:$true] %s215
          %221 = dma.hbm_to_vmem [thread:$0]  %s214, 4096, %s216, %s205, 128, 128, 8
        $region32: #{tpu_custom_call.1} parent=27 // pred_fallthru
          _
      $region28: #{tpu_custom_call.1} parent=5 // pred_fallthru
        _
      %p222 = scmp.le.s32.totalorder 1, %s22
      %p223 = scmp.lt.s32.totalorder %s22, 3
      %p224 = pnand %p222, %p223
      %p225 = pneg %p224
      // Predicated region
      $region33: #{tpu_custom_call.1} parent=5 // pred_check
        _
      $region34: #{tpu_custom_call.1} parent=5 // pred_check_branch
        %227 = sbr.rel (%p224) target = $region36
      $region35: #{tpu_custom_call.1} parent=5 // pred_region
        %s228 = ssub.s32 %s22, 1
        %s229 = sand.u32 %s35, 1
        %s230 = scalar_lea.sflag [#allocation3], %s229
        %s231 = sand.u32 %s35, 1
        %s232 = smul.addr %s231, 256
        %s233 = scalar_lea.vmem [#allocation2], %s232
        // Predicated region
        $region37: #{tpu_custom_call.1} parent=35 // pred_check
          %p234 = pneg %p48
        $region38: #{tpu_custom_call.1} parent=35 // pred_check_branch
          %236 = sbr.rel (%p234) target = $region40
        $region39: #{tpu_custom_call.1} parent=35 // pred_region
          %237 = dma.done %s230, 4096
        $region40: #{tpu_custom_call.1} parent=35 // pred_fallthru
          _
        // Predicated region
        $region41: #{tpu_custom_call.1} parent=35 // pred_check
          %p238 = pneg %p111
        $region42: #{tpu_custom_call.1} parent=35 // pred_check_branch
          %240 = sbr.rel (%p238) target = $region44
        $region43: #{tpu_custom_call.1} parent=35 // pred_region
          %241 = dma.done [#allocation6], 1024
        $region44: #{tpu_custom_call.1} parent=35 // pred_fallthru
          _
        %s242 = sand.u32 %s35, 1
        %s243 = scalar_lea.sflag [#allocation3], %s242
        %s244 = sand.u32 %s35, 1
        %s245 = smul.addr %s244, 256
        %s246 = scalar_lea.vmem [#allocation2], %s245
        %p247 = pneg %p48
        %p248 = pneg %p45
        %p249 = pneg %p69
        %p250 = pneg %p66
        %p251 = pneg %p90
        %p252 = pneg %p87
        %p253 = pneg %p111
        %p254 = pneg %p108
        %p255 = pneg %p137
        %p256 = pneg %p134
        %s257 = sand.u32 %s124, 1
        %s258 = scalar_lea.sflag [#allocation4], %s257
        %s259 = sand.u32 %s124, 1
        %s260 = smul.addr %s259, 128
        %s261 = scalar_lea.vmem [#allocation7], %s260
        %p262 = pneg %p163
        %p263 = pneg %p160
        %s264 = sand.u32 %s150, 1
        %s265 = scalar_lea.sflag [#allocation9], %s264
        %s266 = sand.u32 %s150, 1
        %s267 = smul.addr %s266, 8
        %s268 = scalar_lea.vmem [#allocation8], %s267
        %s269 = smul.u32 32, %s27
        %s270 = smul.u32 32, %s27
        %v272 = vld [vmem:[%s233] sm:$0xff]
        %v273 = vld [vmem:[%s233 + $0x8] sm:$0xff]
        %v274 = vld [vmem:[%s233 + $0x10] sm:$0xff]
        %v275 = vld [vmem:[%s233 + $0x18] sm:$0xff]
        %v276 = vld [vmem:[%s233 + $0x20] sm:$0xff]
        %v277 = vld [vmem:[%s233 + $0x28] sm:$0xff]
        %v278 = vld [vmem:[%s233 + $0x30] sm:$0xff]
        %v279 = vld [vmem:[%s233 + $0x38] sm:$0xff]
        %v280 = vld [vmem:[%s233 + $0x40] sm:$0xff]
        %v281 = vld [vmem:[%s233 + $0x48] sm:$0xff]
        %v282 = vld [vmem:[%s233 + $0x50] sm:$0xff]
        %v283 = vld [vmem:[%s233 + $0x58] sm:$0xff]
        %v284 = vld [vmem:[%s233 + $0x60] sm:$0xff]
        %v285 = vld [vmem:[%s233 + $0x68] sm:$0xff]
        %v286 = vld [vmem:[%s233 + $0x70] sm:$0xff]
        %v287 = vld [vmem:[%s233 + $0x78] sm:$0xff]
        %v288 = vld [vmem:[%s233 + $0x80] sm:$0xff]
        %v289 = vld [vmem:[%s233 + $0x88] sm:$0xff]
        %v290 = vld [vmem:[%s233 + $0x90] sm:$0xff]
        %v291 = vld [vmem:[%s233 + $0x98] sm:$0xff]
        %v292 = vld [vmem:[%s233 + $0xa0] sm:$0xff]
        %v293 = vld [vmem:[%s233 + $0xa8] sm:$0xff]
        %v294 = vld [vmem:[%s233 + $0xb0] sm:$0xff]
        %v295 = vld [vmem:[%s233 + $0xb8] sm:$0xff]
        %v296 = vld [vmem:[%s233 + $0xc0] sm:$0xff]
        %v297 = vld [vmem:[%s233 + $0xc8] sm:$0xff]
        %v298 = vld [vmem:[%s233 + $0xd0] sm:$0xff]
        %v299 = vld [vmem:[%s233 + $0xd8] sm:$0xff]
        %v300 = vld [vmem:[%s233 + $0xe0] sm:$0xff]
        %v301 = vld [vmem:[%s233 + $0xe8] sm:$0xff]
        %v302 = vld [vmem:[%s233 + $0xf0] sm:$0xff]
        %v303 = vld [vmem:[%s233 + $0xf8] sm:$0xff]
        %v304 = vld [vmem:[%s1] sm:$0x1]
        %v306 = vlaneseq
        %v307 = vshrl.u32 %v306, 7
        %v308 = vsub.s32 0, %v307
        %v309 = vrot.slane %v304, %v308
        %v311 = vsub.f32 %v272, %v309
        %v312 = vsub.f32 %v273, %v309
        %v313 = vsub.f32 %v274, %v309
        %v314 = vsub.f32 %v275, %v309
        %v315 = vsub.f32 %v276, %v309
        %v316 = vsub.f32 %v277, %v309
        %v317 = vsub.f32 %v278, %v309
        %v318 = vsub.f32 %v279, %v309
        %v319 = vsub.f32 %v280, %v309
        %v320 = vsub.f32 %v281, %v309
        %v321 = vsub.f32 %v282, %v309
        %v322 = vsub.f32 %v283, %v309
        %v323 = vsub.f32 %v284, %v309
        %v324 = vsub.f32 %v285, %v309
        %v325 = vsub.f32 %v286, %v309
        %v326 = vsub.f32 %v287, %v309
        %v327 = vsub.f32 %v288, %v309
        %v328 = vsub.f32 %v289, %v309
        %v329 = vsub.f32 %v290, %v309
        %v330 = vsub.f32 %v291, %v309
        %v331 = vsub.f32 %v292, %v309
        %v332 = vsub.f32 %v293, %v309
        %v333 = vsub.f32 %v294, %v309
        %v334 = vsub.f32 %v295, %v309
        %v335 = vsub.f32 %v296, %v309
        %v336 = vsub.f32 %v297, %v309
        %v337 = vsub.f32 %v298, %v309
        %v338 = vsub.f32 %v299, %v309
        %v339 = vsub.f32 %v300, %v309
        %v340 = vsub.f32 %v301, %v309
        %v341 = vsub.f32 %v302, %v309
        %v342 = vsub.f32 %v303, %v309
        %v343 = vld [vmem:[%s2] sm:$0x1]
        %v345 = vlaneseq
        %v346 = vshrl.u32 %v345, 7
        %v347 = vsub.s32 0, %v346
        %v348 = vrot.slane %v343, %v347
        %v350 = vmul.f32 %v311, %v348
        %v351 = vmul.f32 %v312, %v348
        %v352 = vmul.f32 %v313, %v348
        %v353 = vmul.f32 %v314, %v348
        %v354 = vmul.f32 %v315, %v348
        %v355 = vmul.f32 %v316, %v348
        %v356 = vmul.f32 %v317, %v348
        %v357 = vmul.f32 %v318, %v348
        %v358 = vmul.f32 %v319, %v348
        %v359 = vmul.f32 %v320, %v348
        %v360 = vmul.f32 %v321, %v348
        %v361 = vmul.f32 %v322, %v348
        %v362 = vmul.f32 %v323, %v348
        %v363 = vmul.f32 %v324, %v348
        %v364 = vmul.f32 %v325, %v348
        %v365 = vmul.f32 %v326, %v348
        %v366 = vmul.f32 %v327, %v348
        %v367 = vmul.f32 %v328, %v348
        %v368 = vmul.f32 %v329, %v348
        %v369 = vmul.f32 %v330, %v348
        %v370 = vmul.f32 %v331, %v348
        %v371 = vmul.f32 %v332, %v348
        %v372 = vmul.f32 %v333, %v348
        %v373 = vmul.f32 %v334, %v348
        %v374 = vmul.f32 %v335, %v348
        %v375 = vmul.f32 %v336, %v348
        %v376 = vmul.f32 %v337, %v348
        %v377 = vmul.f32 %v338, %v348
        %v378 = vmul.f32 %v339, %v348
        %v379 = vmul.f32 %v340, %v348
        %v380 = vmul.f32 %v341, %v348
        %v381 = vmul.f32 %v342, %v348
        %v382 = vadd.f32 %v350, 0.0001
        %v383 = vadd.f32 %v351, 0.0001
        %v384 = vadd.f32 %v352, 0.0001
        %v385 = vadd.f32 %v353, 0.0001
        %v386 = vadd.f32 %v354, 0.0001
        %v387 = vadd.f32 %v355, 0.0001
        %v388 = vadd.f32 %v356, 0.0001
        %v389 = vadd.f32 %v357, 0.0001
        %v390 = vadd.f32 %v358, 0.0001
        %v391 = vadd.f32 %v359, 0.0001
        %v392 = vadd.f32 %v360, 0.0001
        %v393 = vadd.f32 %v361, 0.0001
        %v394 = vadd.f32 %v362, 0.0001
        %v395 = vadd.f32 %v363, 0.0001
        %v396 = vadd.f32 %v364, 0.0001
        %v397 = vadd.f32 %v365, 0.0001
        %v398 = vadd.f32 %v366, 0.0001
        %v399 = vadd.f32 %v367, 0.0001
        %v400 = vadd.f32 %v368, 0.0001
        %v401 = vadd.f32 %v369, 0.0001
        %v402 = vadd.f32 %v370, 0.0001
        %v403 = vadd.f32 %v371, 0.0001
        %v404 = vadd.f32 %v372, 0.0001
        %v405 = vadd.f32 %v373, 0.0001
        %v406 = vadd.f32 %v374, 0.0001
        %v407 = vadd.f32 %v375, 0.0001
        %v408 = vadd.f32 %v376, 0.0001
        %v409 = vadd.f32 %v377, 0.0001
        %v410 = vadd.f32 %v378, 0.0001
        %v411 = vadd.f32 %v379, 0.0001
        %v412 = vadd.f32 %v380, 0.0001
        %v413 = vadd.f32 %v381, 0.0001
        %v414 = vpack.c.bf16 %v383, %v382
        %v415 = vpack.c.bf16 %v385, %v384
        %v416 = vpack.c.bf16 %v387, %v386
        %v417 = vpack.c.bf16 %v389, %v388
        %v418 = vpack.c.bf16 %v391, %v390
        %v419 = vpack.c.bf16 %v393, %v392
        %v420 = vpack.c.bf16 %v395, %v394
        %v421 = vpack.c.bf16 %v397, %v396
        %v422 = vpack.c.bf16 %v399, %v398
        %v423 = vpack.c.bf16 %v401, %v400
        %v424 = vpack.c.bf16 %v403, %v402
        %v425 = vpack.c.bf16 %v405, %v404
        %v426 = vpack.c.bf16 %v407, %v406
        %v427 = vpack.c.bf16 %v409, %v408
        %v428 = vpack.c.bf16 %v411, %v410
        %v429 = vpack.c.bf16 %v413, %v412
        %v430 = vld [vmem:[#allocation5] sm:$0xf]
        %v431 = vld [vmem:[#allocation5 + $0x4] sm:$0xf]
        %v432 = vld [vmem:[#allocation5 + $0x8] sm:$0xf]
        %v433 = vld [vmem:[#allocation5 + $0xc] sm:$0xf]
        %v434 = vld [vmem:[#allocation5 + $0x10] sm:$0xf]
        %v435 = vld [vmem:[#allocation5 + $0x14] sm:$0xf]
        %v436 = vld [vmem:[#allocation5 + $0x18] sm:$0xf]
        %v437 = vld [vmem:[#allocation5 + $0x1c] sm:$0xf]
        %v438 = vld [vmem:[#allocation5 + $0x20] sm:$0xf]
        %v439 = vld [vmem:[#allocation5 + $0x24] sm:$0xf]
        %v440 = vld [vmem:[#allocation5 + $0x28] sm:$0xf]
        %v441 = vld [vmem:[#allocation5 + $0x2c] sm:$0xf]
        %v442 = vld [vmem:[#allocation5 + $0x30] sm:$0xf]
        %v443 = vld [vmem:[#allocation5 + $0x34] sm:$0xf]
        %v444 = vld [vmem:[#allocation5 + $0x38] sm:$0xf]
        %v445 = vld [vmem:[#allocation5 + $0x3c] sm:$0xf]
        %v462 = vunpack.c.l.b16 %v430
        %v463 = vunpack.c.l.b16 %v431
        %v464 = vunpack.c.l.b16 %v432
        %v465 = vunpack.c.l.b16 %v433
        %v466 = vunpack.c.l.b16 %v434
        %v467 = vunpack.c.l.b16 %v435
        %v468 = vunpack.c.l.b16 %v436
        %v469 = vunpack.c.l.b16 %v437
        %v470 = vunpack.c.l.b16 %v438
        %v471 = vunpack.c.l.b16 %v439
        %v472 = vunpack.c.l.b16 %v440
        %v473 = vunpack.c.l.b16 %v441
        %v474 = vunpack.c.l.b16 %v442
        %v475 = vunpack.c.l.b16 %v443
        %v476 = vunpack.c.l.b16 %v444
        %v477 = vunpack.c.l.b16 %v445
        %v478 = vpack.c.b16 %v463, %v462
        %v479 = vpack.c.b16 %v465, %v464
        %v480 = vpack.c.b16 %v467, %v466
        %v481 = vpack.c.b16 %v469, %v468
        %v482 = vpack.c.b16 %v471, %v470
        %v483 = vpack.c.b16 %v473, %v472
        %v484 = vpack.c.b16 %v475, %v474
        %v485 = vpack.c.b16 %v477, %v476
        %494 = vmatprep.subr.bf16.mxu0 0
        %495 = vmatpush1.bf16.msra.mxu0 %v478
        %496 = vmatprep.subr.bf16.mxu0 0
        %497 = vmatpush1.bf16.msra.mxu0 %v479
        %498 = vmatprep.subr.bf16.mxu0 0
        %499 = vmatpush1.bf16.msra.mxu0 %v480
        %500 = vmatprep.subr.bf16.mxu0 0
        %501 = vmatpush1.bf16.msra.mxu0 %v481
        %502 = vmatprep.subr.bf16.mxu0 0
        %503 = vmatpush1.bf16.msra.mxu0 %v482
        %504 = vmatprep.subr.bf16.mxu0 0
        %505 = vmatpush1.bf16.msra.mxu0 %v483
        %506 = vmatprep.subr.bf16.mxu0 0
        %507 = vmatpush1.bf16.msra.mxu0 %v484
        %508 = vmatprep.subr.bf16.mxu0 0
        %509 = vmatpush1.bf16.msra.mxu0 %v485
        %510 = vmatprep.subr.bf16.mxu0 0
        %511 = vmatpush1.bf16.msra.mxu0 0
        %512 = vmatprep.subr.bf16.mxu0 0
        %513 = vmatpush1.bf16.msra.mxu0 0
        %514 = vmatprep.subr.bf16.mxu0 0
        %515 = vmatpush1.bf16.msra.mxu0 0
        %516 = vmatprep.subr.bf16.mxu0 0
        %517 = vmatpush1.bf16.msra.mxu0 0
        %518 = vmatprep.subr.bf16.mxu0 0
        %519 = vmatpush1.bf16.msra.mxu0 0
        %520 = vmatprep.subr.bf16.mxu0 0
        %521 = vmatpush1.bf16.msra.mxu0 0
        %522 = vmatprep.subr.bf16.mxu0 0
        %523 = vmatpush1.bf16.msra.mxu0 0
        %524 = vmatprep.subr.bf16.mxu0 0
        %525 = vmatpush1.bf16.msra.mxu0 0
        %526 = vmatprep.mubr.bf16.mxu0 0
        %527 = vmatmul.mubr.bf16.gmra.mrb[0].mxu0 %v414
        %v528 = vpop.f32.mrb[0].mxu0
        %v529 = vadd.f32 0.0, %v528
        %v530 = vpop.f32.mrb[0].mxu0
        %v531 = vpop.f32.mrb[0].mxu0
        %v532 = vadd.f32 0.0, %v531
        %v533 = vpop.f32.mrb[0].mxu0
        %534 = vmatprep.mubr.bf16.mxu0 0
        %535 = vmatmul.mubr.bf16.gmra.mrb[0].mxu0 %v415
        %v536 = vpop.f32.mrb[0].mxu0
        %v537 = vadd.f32 0.0, %v536
        %v538 = vpop.f32.mrb[0].mxu0
        %v539 = vpop.f32.mrb[0].mxu0
        %v540 = vadd.f32 0.0, %v539
        %v541 = vpop.f32.mrb[0].mxu0
        %542 = vmatprep.mubr.bf16.mxu0 0
        %543 = vmatmul.mubr.bf16.gmra.mrb[0].mxu0 %v416
        %v544 = vpop.f32.mrb[0].mxu0
        %v545 = vadd.f32 0.0, %v544
        %v546 = vpop.f32.mrb[0].mxu0
        %v547 = vpop.f32.mrb[0].mxu0
        %v548 = vadd.f32 0.0, %v547
        %v549 = vpop.f32.mrb[0].mxu0
        %550 = vmatprep.mubr.bf16.mxu0 0
        %551 = vmatmul.mubr.bf16.gmra.mrb[0].mxu0 %v417
        %v552 = vpop.f32.mrb[0].mxu0
        %v553 = vadd.f32 0.0, %v552
        %v554 = vpop.f32.mrb[0].mxu0
        %v555 = vpop.f32.mrb[0].mxu0
        %v556 = vadd.f32 0.0, %v555
        %v557 = vpop.f32.mrb[0].mxu0
        %558 = vmatprep.mubr.bf16.mxu0 0
        %559 = vmatmul.mubr.bf16.gmra.mrb[0].mxu0 %v418
        %v560 = vpop.f32.mrb[0].mxu0
        %v561 = vadd.f32 0.0, %v560
        %v562 = vpop.f32.mrb[0].mxu0
        %v563 = vpop.f32.mrb[0].mxu0
        %v564 = vadd.f32 0.0, %v563
        %v565 = vpop.f32.mrb[0].mxu0
        %566 = vmatprep.mubr.bf16.mxu0 0
        %567 = vmatmul.mubr.bf16.gmra.mrb[0].mxu0 %v419
        %v568 = vpop.f32.mrb[0].mxu0
        %v569 = vadd.f32 0.0, %v568
        %v570 = vpop.f32.mrb[0].mxu0
        %v571 = vpop.f32.mrb[0].mxu0
        %v572 = vadd.f32 0.0, %v571
        %v573 = vpop.f32.mrb[0].mxu0
        %574 = vmatprep.mubr.bf16.mxu0 0
        %575 = vmatmul.mubr.bf16.gmra.mrb[0].mxu0 %v420
        %v576 = vpop.f32.mrb[0].mxu0
        %v577 = vadd.f32 0.0, %v576
        %v578 = vpop.f32.mrb[0].mxu0
        %v579 = vpop.f32.mrb[0].mxu0
        %v580 = vadd.f32 0.0, %v579
        %v581 = vpop.f32.mrb[0].mxu0
        %582 = vmatprep.mubr.bf16.mxu0 0
        %583 = vmatmul.mubr.bf16.gmra.mrb[0].mxu0 %v421
        %v584 = vpop.f32.mrb[0].mxu0
        %v585 = vadd.f32 0.0, %v584
        %v586 = vpop.f32.mrb[0].mxu0
        %v587 = vpop.f32.mrb[0].mxu0
        %v588 = vadd.f32 0.0, %v587
        %v589 = vpop.f32.mrb[0].mxu0
        %590 = vmatprep.mubr.bf16.mxu0 0
        %591 = vmatmul.mubr.bf16.gmra.mrb[0].mxu0 %v422
        %v592 = vpop.f32.mrb[0].mxu0
        %v593 = vadd.f32 0.0, %v592
        %v594 = vpop.f32.mrb[0].mxu0
        %v595 = vpop.f32.mrb[0].mxu0
        %v596 = vadd.f32 0.0, %v595
        %v597 = vpop.f32.mrb[0].mxu0
        %598 = vmatprep.mubr.bf16.mxu0 0
        %599 = vmatmul.mubr.bf16.gmra.mrb[0].mxu0 %v423
        %v600 = vpop.f32.mrb[0].mxu0
        %v601 = vadd.f32 0.0, %v600
        %v602 = vpop.f32.mrb[0].mxu0
        %v603 = vpop.f32.mrb[0].mxu0
        %v604 = vadd.f32 0.0, %v603
        %v605 = vpop.f32.mrb[0].mxu0
        %606 = vmatprep.mubr.bf16.mxu0 0
        %607 = vmatmul.mubr.bf16.gmra.mrb[0].mxu0 %v424
        %v608 = vpop.f32.mrb[0].mxu0
        %v609 = vadd.f32 0.0, %v608
        %v610 = vpop.f32.mrb[0].mxu0
        %v611 = vpop.f32.mrb[0].mxu0
        %v612 = vadd.f32 0.0, %v611
        %v613 = vpop.f32.mrb[0].mxu0
        %614 = vmatprep.mubr.bf16.mxu0 0
        %615 = vmatmul.mubr.bf16.gmra.mrb[0].mxu0 %v425
        %v616 = vpop.f32.mrb[0].mxu0
        %v617 = vadd.f32 0.0, %v616
        %v618 = vpop.f32.mrb[0].mxu0
        %v619 = vpop.f32.mrb[0].mxu0
        %v620 = vadd.f32 0.0, %v619
        %v621 = vpop.f32.mrb[0].mxu0
        %622 = vmatprep.mubr.bf16.mxu0 0
        %623 = vmatmul.mubr.bf16.gmra.mrb[0].mxu0 %v426
        %v624 = vpop.f32.mrb[0].mxu0
        %v625 = vadd.f32 0.0, %v624
        %v626 = vpop.f32.mrb[0].mxu0
        %v627 = vpop.f32.mrb[0].mxu0
        %v628 = vadd.f32 0.0, %v627
        %v629 = vpop.f32.mrb[0].mxu0
        %630 = vmatprep.mubr.bf16.mxu0 0
        %631 = vmatmul.mubr.bf16.gmra.mrb[0].mxu0 %v427
        %v632 = vpop.f32.mrb[0].mxu0
        %v633 = vadd.f32 0.0, %v632
        %v634 = vpop.f32.mrb[0].mxu0
        %v635 = vpop.f32.mrb[0].mxu0
        %v636 = vadd.f32 0.0, %v635
        %v637 = vpop.f32.mrb[0].mxu0
        %638 = vmatprep.mubr.bf16.mxu0 0
        %639 = vmatmul.mubr.bf16.gmra.mrb[0].mxu0 %v428
        %v640 = vpop.f32.mrb[0].mxu0
        %v641 = vadd.f32 0.0, %v640
        %v642 = vpop.f32.mrb[0].mxu0
        %v643 = vpop.f32.mrb[0].mxu0
        %v644 = vadd.f32 0.0, %v643
        %v645 = vpop.f32.mrb[0].mxu0
        %646 = vmatprep.mubr.bf16.mxu0 0
        %647 = vmatmul.mubr.bf16.gmra.mrb[0].mxu0 %v429
        %v648 = vpop.f32.mrb[0].mxu0
        %v649 = vadd.f32 0.0, %v648
        %v650 = vpop.f32.mrb[0].mxu0
        %v651 = vpop.f32.mrb[0].mxu0
        %v652 = vadd.f32 0.0, %v651
        %v653 = vpop.f32.mrb[0].mxu0
        %654 = vdwg.mxu0
        %v655 = vmax.f32 %v529, 0.0
        %v656 = vmax.f32 %v532, 0.0
        %v657 = vmax.f32 %v537, 0.0
        %v658 = vmax.f32 %v540, 0.0
        %v659 = vmax.f32 %v545, 0.0
        %v660 = vmax.f32 %v548, 0.0
        %v661 = vmax.f32 %v553, 0.0
        %v662 = vmax.f32 %v556, 0.0
        %v663 = vmax.f32 %v561, 0.0
        %v664 = vmax.f32 %v564, 0.0
        %v665 = vmax.f32 %v569, 0.0
        %v666 = vmax.f32 %v572, 0.0
        %v667 = vmax.f32 %v577, 0.0
        %v668 = vmax.f32 %v580, 0.0
        %v669 = vmax.f32 %v585, 0.0
        %v670 = vmax.f32 %v588, 0.0
        %v671 = vmax.f32 %v593, 0.0
        %v672 = vmax.f32 %v596, 0.0
        %v673 = vmax.f32 %v601, 0.0
        %v674 = vmax.f32 %v604, 0.0
        %v675 = vmax.f32 %v609, 0.0
        %v676 = vmax.f32 %v612, 0.0
        %v677 = vmax.f32 %v617, 0.0
        %v678 = vmax.f32 %v620, 0.0
        %v679 = vmax.f32 %v625, 0.0
        %v680 = vmax.f32 %v628, 0.0
        %v681 = vmax.f32 %v633, 0.0
        %v682 = vmax.f32 %v636, 0.0
        %v683 = vmax.f32 %v641, 0.0
        %v684 = vmax.f32 %v644, 0.0
        %v685 = vmax.f32 %v649, 0.0
        %v686 = vmax.f32 %v652, 0.0
        %s687 = smul.u32 %s27, 256
        %v688 = vlaneseq
        %v689 = vshrl.u32 %v688, 7
        %v690 = vadd.s32 %v689, 8
        %v691 = vadd.s32 %v689, 16
        %v692 = vadd.s32 %v689, 24
        %v693 = vadd.s32 %v689, 32
        %v694 = vadd.s32 %v689, 40
        %v695 = vadd.s32 %v689, 48
        %v696 = vadd.s32 %v689, 56
        %v697 = vadd.s32 %v689, 64
        %v698 = vadd.s32 %v689, 72
        %v699 = vadd.s32 %v689, 80
        %v700 = vadd.s32 %v689, 88
        %v701 = vadd.s32 %v689, 96
        %v702 = vadd.s32 %v689, 104
        %v703 = vadd.s32 %v689, 112
        %v704 = vadd.s32 %v689, 120
        %v705 = vadd.s32 %v689, 128
        %v706 = vadd.s32 %v689, 136
        %v707 = vadd.s32 %v689, 144
        %v708 = vadd.s32 %v689, 152
        %v709 = vadd.s32 %v689, 160
        %v710 = vadd.s32 %v689, 168
        %v711 = vadd.s32 %v689, 176
        %v712 = vadd.s32 %v689, 184
        %v713 = vadd.s32 %v689, 192
        %v714 = vadd.s32 %v689, 200
        %v715 = vadd.s32 %v689, 208
        %v716 = vadd.s32 %v689, 216
        %v717 = vadd.s32 %v689, 224
        %v718 = vadd.s32 %v689, 232
        %v719 = vadd.s32 %v689, 240
        %v720 = vadd.s32 %v689, 248
        %v721 = vstv %s687
        %v722 = vadd.s32 %v689, %v721
        %v723 = vadd.s32 %v690, %v721
        %v724 = vadd.s32 %v691, %v721
        %v725 = vadd.s32 %v692, %v721
        %v726 = vadd.s32 %v693, %v721
        %v727 = vadd.s32 %v694, %v721
        %v728 = vadd.s32 %v695, %v721
        %v729 = vadd.s32 %v696, %v721
        %v730 = vadd.s32 %v697, %v721
        %v731 = vadd.s32 %v698, %v721
        %v732 = vadd.s32 %v699, %v721
        %v733 = vadd.s32 %v700, %v721
        %v734 = vadd.s32 %v701, %v721
        %v735 = vadd.s32 %v702, %v721
        %v736 = vadd.s32 %v703, %v721
        %v737 = vadd.s32 %v704, %v721
        %v738 = vadd.s32 %v705, %v721
        %v739 = vadd.s32 %v706, %v721
        %v740 = vadd.s32 %v707, %v721
        %v741 = vadd.s32 %v708, %v721
        %v742 = vadd.s32 %v709, %v721
        %v743 = vadd.s32 %v710, %v721
        %v744 = vadd.s32 %v711, %v721
        %v745 = vadd.s32 %v712, %v721
        %v746 = vadd.s32 %v713, %v721
        %v747 = vadd.s32 %v714, %v721
        %v748 = vadd.s32 %v715, %v721
        %v749 = vadd.s32 %v716, %v721
        %v750 = vadd.s32 %v717, %v721
        %v751 = vadd.s32 %v718, %v721
        %v752 = vadd.s32 %v719, %v721
        %v753 = vadd.s32 %v720, %v721
        %vm754 = vcmp.lt.s32.totalorder %v722, 320
        %vm755 = vcmp.lt.s32.totalorder %v723, 320
        %vm756 = vcmp.lt.s32.totalorder %v724, 320
        %vm757 = vcmp.lt.s32.totalorder %v725, 320
        %vm758 = vcmp.lt.s32.totalorder %v726, 320
        %vm759 = vcmp.lt.s32.totalorder %v727, 320
        %vm760 = vcmp.lt.s32.totalorder %v728, 320
        %vm761 = vcmp.lt.s32.totalorder %v729, 320
        %vm762 = vcmp.lt.s32.totalorder %v730, 320
        %vm763 = vcmp.lt.s32.totalorder %v731, 320
        %vm764 = vcmp.lt.s32.totalorder %v732, 320
        %vm765 = vcmp.lt.s32.totalorder %v733, 320
        %vm766 = vcmp.lt.s32.totalorder %v734, 320
        %vm767 = vcmp.lt.s32.totalorder %v735, 320
        %vm768 = vcmp.lt.s32.totalorder %v736, 320
        %vm769 = vcmp.lt.s32.totalorder %v737, 320
        %vm770 = vcmp.lt.s32.totalorder %v738, 320
        %vm771 = vcmp.lt.s32.totalorder %v739, 320
        %vm772 = vcmp.lt.s32.totalorder %v740, 320
        %vm773 = vcmp.lt.s32.totalorder %v741, 320
        %vm774 = vcmp.lt.s32.totalorder %v742, 320
        %vm775 = vcmp.lt.s32.totalorder %v743, 320
        %vm776 = vcmp.lt.s32.totalorder %v744, 320
        %vm777 = vcmp.lt.s32.totalorder %v745, 320
        %vm778 = vcmp.lt.s32.totalorder %v746, 320
        %vm779 = vcmp.lt.s32.totalorder %v747, 320
        %vm780 = vcmp.lt.s32.totalorder %v748, 320
        %vm781 = vcmp.lt.s32.totalorder %v749, 320
        %vm782 = vcmp.lt.s32.totalorder %v750, 320
        %vm783 = vcmp.lt.s32.totalorder %v751, 320
        %vm784 = vcmp.lt.s32.totalorder %v752, 320
        %vm785 = vcmp.lt.s32.totalorder %v753, 320
        %v786 = vsel %vm754, %v655, 0.0
        %v787 = vsel %vm755, %v656, 0.0
        %v788 = vsel %vm756, %v657, 0.0
        %v789 = vsel %vm757, %v658, 0.0
        %v790 = vsel %vm758, %v659, 0.0
        %v791 = vsel %vm759, %v660, 0.0
        %v792 = vsel %vm760, %v661, 0.0
        %v793 = vsel %vm761, %v662, 0.0
        %v794 = vsel %vm762, %v663, 0.0
        %v795 = vsel %vm763, %v664, 0.0
        %v796 = vsel %vm764, %v665, 0.0
        %v797 = vsel %vm765, %v666, 0.0
        %v798 = vsel %vm766, %v667, 0.0
        %v799 = vsel %vm767, %v668, 0.0
        %v800 = vsel %vm768, %v669, 0.0
        %v801 = vsel %vm769, %v670, 0.0
        %v802 = vsel %vm770, %v671, 0.0
        %v803 = vsel %vm771, %v672, 0.0
        %v804 = vsel %vm772, %v673, 0.0
        %v805 = vsel %vm773, %v674, 0.0
        %v806 = vsel %vm774, %v675, 0.0
        %v807 = vsel %vm775, %v676, 0.0
        %v808 = vsel %vm776, %v677, 0.0
        %v809 = vsel %vm777, %v678, 0.0
        %v810 = vsel %vm778, %v679, 0.0
        %v811 = vsel %vm779, %v680, 0.0
        %v812 = vsel %vm780, %v681, 0.0
        %v813 = vsel %vm781, %v682, 0.0
        %v814 = vsel %vm782, %v683, 0.0
        %v815 = vsel %vm783, %v684, 0.0
        %v816 = vsel %vm784, %v685, 0.0
        %v817 = vsel %vm785, %v686, 0.0
        %v818 = vpack.c.bf16 %v787, %v786
        %v819 = vpack.c.bf16 %v789, %v788
        %v820 = vpack.c.bf16 %v791, %v790
        %v821 = vpack.c.bf16 %v793, %v792
        %v822 = vpack.c.bf16 %v795, %v794
        %v823 = vpack.c.bf16 %v797, %v796
        %v824 = vpack.c.bf16 %v799, %v798
        %v825 = vpack.c.bf16 %v801, %v800
        %v826 = vpack.c.bf16 %v803, %v802
        %v827 = vpack.c.bf16 %v805, %v804
        %v828 = vpack.c.bf16 %v807, %v806
        %v829 = vpack.c.bf16 %v809, %v808
        %v830 = vpack.c.bf16 %v811, %v810
        %v831 = vpack.c.bf16 %v813, %v812
        %v832 = vpack.c.bf16 %v815, %v814
        %v833 = vpack.c.bf16 %v817, %v816
        %v850 = vunpack.c.l.b16 %v818
        %v851 = vunpack.c.h.b16 %v818
        %v852 = vunpack.c.l.b16 %v819
        %v853 = vunpack.c.h.b16 %v819
        %v854 = vunpack.c.l.b16 %v820
        %v855 = vunpack.c.h.b16 %v820
        %v856 = vunpack.c.l.b16 %v821
        %v857 = vunpack.c.h.b16 %v821
        %v858 = vunpack.c.l.b16 %v822
        %v859 = vunpack.c.h.b16 %v822
        %v860 = vunpack.c.l.b16 %v823
        %v861 = vunpack.c.h.b16 %v823
        %v862 = vunpack.c.l.b16 %v824
        %v863 = vunpack.c.h.b16 %v824
        %v864 = vunpack.c.l.b16 %v825
        %v865 = vunpack.c.h.b16 %v825
        %v866 = vunpack.c.l.b16 %v826
        %v867 = vunpack.c.h.b16 %v826
        %v868 = vunpack.c.l.b16 %v827
        %v869 = vunpack.c.h.b16 %v827
        %v870 = vunpack.c.l.b16 %v828
        %v871 = vunpack.c.h.b16 %v828
        %v872 = vunpack.c.l.b16 %v829
        %v873 = vunpack.c.h.b16 %v829
        %v874 = vunpack.c.l.b16 %v830
        %v875 = vunpack.c.h.b16 %v830
        %v876 = vunpack.c.l.b16 %v831
        %v877 = vunpack.c.h.b16 %v831
        %v878 = vunpack.c.l.b16 %v832
        %v879 = vunpack.c.h.b16 %v832
        %v880 = vunpack.c.l.b16 %v833
        %v881 = vunpack.c.h.b16 %v833
        %v882 = vpack.c.b16 %v850, %v850
        %v883 = vpack.c.b16 %v851, %v851
        %v884 = vpack.c.b16 %v852, %v852
        %v885 = vpack.c.b16 %v853, %v853
        %v886 = vpack.c.b16 %v854, %v854
        %v887 = vpack.c.b16 %v855, %v855
        %v888 = vpack.c.b16 %v856, %v856
        %v889 = vpack.c.b16 %v857, %v857
        %v890 = vpack.c.b16 %v858, %v858
        %v891 = vpack.c.b16 %v859, %v859
        %v892 = vpack.c.b16 %v860, %v860
        %v893 = vpack.c.b16 %v861, %v861
        %v894 = vpack.c.b16 %v862, %v862
        %v895 = vpack.c.b16 %v863, %v863
        %v896 = vpack.c.b16 %v864, %v864
        %v897 = vpack.c.b16 %v865, %v865
        %v898 = vpack.c.b16 %v866, %v866
        %v899 = vpack.c.b16 %v867, %v867
        %v900 = vpack.c.b16 %v868, %v868
        %v901 = vpack.c.b16 %v869, %v869
        %v902 = vpack.c.b16 %v870, %v870
        %v903 = vpack.c.b16 %v871, %v871
        %v904 = vpack.c.b16 %v872, %v872
        %v905 = vpack.c.b16 %v873, %v873
        %v906 = vpack.c.b16 %v874, %v874
        %v907 = vpack.c.b16 %v875, %v875
        %v908 = vpack.c.b16 %v876, %v876
        %v909 = vpack.c.b16 %v877, %v877
        %v910 = vpack.c.b16 %v878, %v878
        %v911 = vpack.c.b16 %v879, %v879
        %v912 = vpack.c.b16 %v880, %v880
        %v913 = vpack.c.b16 %v881, %v881
        %946 = vst [vmem:[%s261] sm:$0xf] %v882
        %947 = vst [vmem:[%s261 + $0x4] sm:$0xf] %v883
        %948 = vst [vmem:[%s261 + $0x8] sm:$0xf] %v884
        %949 = vst [vmem:[%s261 + $0xc] sm:$0xf] %v885
        %950 = vst [vmem:[%s261 + $0x10] sm:$0xf] %v886
        %951 = vst [vmem:[%s261 + $0x14] sm:$0xf] %v887
        %952 = vst [vmem:[%s261 + $0x18] sm:$0xf] %v888
        %953 = vst [vmem:[%s261 + $0x1c] sm:$0xf] %v889
        %954 = vst [vmem:[%s261 + $0x20] sm:$0xf] %v890
        %955 = vst [vmem:[%s261 + $0x24] sm:$0xf] %v891
        %956 = vst [vmem:[%s261 + $0x28] sm:$0xf] %v892
        %957 = vst [vmem:[%s261 + $0x2c] sm:$0xf] %v893
        %958 = vst [vmem:[%s261 + $0x30] sm:$0xf] %v894
        %959 = vst [vmem:[%s261 + $0x34] sm:$0xf] %v895
        %960 = vst [vmem:[%s261 + $0x38] sm:$0xf] %v896
        %961 = vst [vmem:[%s261 + $0x3c] sm:$0xf] %v897
        %962 = vst [vmem:[%s261 + $0x40] sm:$0xf] %v898
        %963 = vst [vmem:[%s261 + $0x44] sm:$0xf] %v899
        %964 = vst [vmem:[%s261 + $0x48] sm:$0xf] %v900
        %965 = vst [vmem:[%s261 + $0x4c] sm:$0xf] %v901
        %966 = vst [vmem:[%s261 + $0x50] sm:$0xf] %v902
        %967 = vst [vmem:[%s261 + $0x54] sm:$0xf] %v903
        %968 = vst [vmem:[%s261 + $0x58] sm:$0xf] %v904
        %969 = vst [vmem:[%s261 + $0x5c] sm:$0xf] %v905
        %970 = vst [vmem:[%s261 + $0x60] sm:$0xf] %v906
        %971 = vst [vmem:[%s261 + $0x64] sm:$0xf] %v907
        %972 = vst [vmem:[%s261 + $0x68] sm:$0xf] %v908
        %973 = vst [vmem:[%s261 + $0x6c] sm:$0xf] %v909
        %974 = vst [vmem:[%s261 + $0x70] sm:$0xf] %v910
        %975 = vst [vmem:[%s261 + $0x74] sm:$0xf] %v911
        %976 = vst [vmem:[%s261 + $0x78] sm:$0xf] %v912
        %977 = vst [vmem:[%s261 + $0x7c] sm:$0xf] %v913
        %v978 = vadd.f32 %v786, %v787
        %v979 = vadd.f32 %v978, %v788
        %v980 = vadd.f32 %v979, %v789
        %v981 = vadd.f32 %v980, %v790
        %v982 = vadd.f32 %v981, %v791
        %v983 = vadd.f32 %v982, %v792
        %v984 = vadd.f32 %v983, %v793
        %v985 = vadd.f32 %v984, %v794
        %v986 = vadd.f32 %v985, %v795
        %v987 = vadd.f32 %v986, %v796
        %v988 = vadd.f32 %v987, %v797
        %v989 = vadd.f32 %v988, %v798
        %v990 = vadd.f32 %v989, %v799
        %v991 = vadd.f32 %v990, %v800
        %v992 = vadd.f32 %v991, %v801
        %v993 = vadd.f32 %v992, %v802
        %v994 = vadd.f32 %v993, %v803
        %v995 = vadd.f32 %v994, %v804
        %v996 = vadd.f32 %v995, %v805
        %v997 = vadd.f32 %v996, %v806
        %v998 = vadd.f32 %v997, %v807
        %v999 = vadd.f32 %v998, %v808
        %v1000 = vadd.f32 %v999, %v809
        %v1001 = vadd.f32 %v1000, %v810
        %v1002 = vadd.f32 %v1001, %v811
        %v1003 = vadd.f32 %v1002, %v812
        %v1004 = vadd.f32 %v1003, %v813
        %v1005 = vadd.f32 %v1004, %v814
        %v1006 = vadd.f32 %v1005, %v815
        %v1007 = vadd.f32 %v1006, %v816
        %v1008 = vadd.f32 %v1007, %v817
        %v1009 = vrot.slane %v1008, 4
        %v1010 = vadd.f32 %v1008, %v1009
        %v1011 = vrot.slane %v1010, 2
        %v1012 = vadd.f32 %v1010, %v1011
        %v1013 = vrot.slane %v1012, 1
        %v1014 = vadd.f32 %v1012, %v1013
        %v1015 = vmul.f32 %v786, %v786
        %v1016 = vmul.f32 %v787, %v787
        %v1017 = vmul.f32 %v788, %v788
        %v1018 = vmul.f32 %v789, %v789
        %v1019 = vmul.f32 %v790, %v790
        %v1020 = vmul.f32 %v791, %v791
        %v1021 = vmul.f32 %v792, %v792
        %v1022 = vmul.f32 %v793, %v793
        %v1023 = vmul.f32 %v794, %v794
        %v1024 = vmul.f32 %v795, %v795
        %v1025 = vmul.f32 %v796, %v796
        %v1026 = vmul.f32 %v797, %v797
        %v1027 = vmul.f32 %v798, %v798
        %v1028 = vmul.f32 %v799, %v799
        %v1029 = vmul.f32 %v800, %v800
        %v1030 = vmul.f32 %v801, %v801
        %v1031 = vmul.f32 %v802, %v802
        %v1032 = vmul.f32 %v803, %v803
        %v1033 = vmul.f32 %v804, %v804
        %v1034 = vmul.f32 %v805, %v805
        %v1035 = vmul.f32 %v806, %v806
        %v1036 = vmul.f32 %v807, %v807
        %v1037 = vmul.f32 %v808, %v808
        %v1038 = vmul.f32 %v809, %v809
        %v1039 = vmul.f32 %v810, %v810
        %v1040 = vmul.f32 %v811, %v811
        %v1041 = vmul.f32 %v812, %v812
        %v1042 = vmul.f32 %v813, %v813
        %v1043 = vmul.f32 %v814, %v814
        %v1044 = vmul.f32 %v815, %v815
        %v1045 = vmul.f32 %v816, %v816
        %v1046 = vmul.f32 %v817, %v817
        %v1047 = vadd.f32 %v1015, %v1016
        %v1048 = vadd.f32 %v1047, %v1017
        %v1049 = vadd.f32 %v1048, %v1018
        %v1050 = vadd.f32 %v1049, %v1019
        %v1051 = vadd.f32 %v1050, %v1020
        %v1052 = vadd.f32 %v1051, %v1021
        %v1053 = vadd.f32 %v1052, %v1022
        %v1054 = vadd.f32 %v1053, %v1023
        %v1055 = vadd.f32 %v1054, %v1024
        %v1056 = vadd.f32 %v1055, %v1025
        %v1057 = vadd.f32 %v1056, %v1026
        %v1058 = vadd.f32 %v1057, %v1027
        %v1059 = vadd.f32 %v1058, %v1028
        %v1060 = vadd.f32 %v1059, %v1029
        %v1061 = vadd.f32 %v1060, %v1030
        %v1062 = vadd.f32 %v1061, %v1031
        %v1063 = vadd.f32 %v1062, %v1032
        %v1064 = vadd.f32 %v1063, %v1033
        %v1065 = vadd.f32 %v1064, %v1034
        %v1066 = vadd.f32 %v1065, %v1035
        %v1067 = vadd.f32 %v1066, %v1036
        %v1068 = vadd.f32 %v1067, %v1037
        %v1069 = vadd.f32 %v1068, %v1038
        %v1070 = vadd.f32 %v1069, %v1039
        %v1071 = vadd.f32 %v1070, %v1040
        %v1072 = vadd.f32 %v1071, %v1041
        %v1073 = vadd.f32 %v1072, %v1042
        %v1074 = vadd.f32 %v1073, %v1043
        %v1075 = vadd.f32 %v1074, %v1044
        %v1076 = vadd.f32 %v1075, %v1045
        %v1077 = vadd.f32 %v1076, %v1046
        %v1078 = vrot.slane %v1077, 4
        %v1079 = vadd.f32 %v1077, %v1078
        %v1080 = vrot.slane %v1079, 2
        %v1081 = vadd.f32 %v1079, %v1080
        %v1082 = vrot.slane %v1081, 1
        %v1083 = vadd.f32 %v1081, %v1082
        %vm1084 = vcmask 1040384
        %v1085 = vsel %vm1084, %v1014, %v1083
        %vm1086 = vcmask 1041408
        %v1087 = vsel %vm1086, %v1085, 0.0
        %1088 = vst [vmem:[%s268] sm:$0xff] %v1087
        %s1089 = sand.u32 %s124, 1
        %s1090 = scalar_lea.sflag [#allocation4], %s1089
        %s1091 = sand.u32 %s124, 1
        %s1092 = smul.addr %s1091, 128
        %s1093 = scalar_lea.vmem [#allocation7], %s1092
        %s1094 = sand.u32 %s150, 1
        %s1095 = scalar_lea.sflag [#allocation9], %s1094
        %s1096 = sand.u32 %s150, 1
        %s1097 = smul.addr %s1096, 8
        %s1098 = scalar_lea.vmem [#allocation8], %s1097
        // Predicated region
        $region45: #{tpu_custom_call.1} parent=35 // pred_check
          %p1099 = pneg %p134
        $region46: #{tpu_custom_call.1} parent=35 // pred_check_branch
          %1101 = sbr.rel (%p1099) target = $region48
        $region47: #{tpu_custom_call.1} parent=35 // pred_region
          %s1102 = smul.u32 32, %s27
          %s1104 = ssub.s32 2048, 2048
          %1105 = vsyncadd %s1090, %s1104
          %s1106 = smul.addr %s1102, 64
          %s1107 = scalar_lea.hbm %s4, %s1106
          %s1108 = sshll.u32 %s1093, 4
          %s1109 = int_to_ptr.vmem [resolvable:$true] %s1108
          %1114 = dma.vmem_to_hbm [thread:$0]  %s1109, 2048, %s1107, %s1090, 64, 64, 4
        $region48: #{tpu_custom_call.1} parent=35 // pred_fallthru
          _
        // Predicated region
        $region49: #{tpu_custom_call.1} parent=35 // pred_check
          %p1115 = pneg %p160
        $region50: #{tpu_custom_call.1} parent=35 // pred_check_branch
          %1117 = sbr.rel (%p1115) target = $region52
        $region51: #{tpu_custom_call.1} parent=35 // pred_region
          %s1119 = ssub.s32 128, 128
          %1120 = vsyncadd %s1095, %s1119
          %s1121 = smul.addr %s27, 128
          %s1122 = scalar_lea.hbm %s5, %s1121
          %s1124 = sshll.u32 %s1098, 4
          %s1125 = int_to_ptr.vmem [resolvable:$true] %s1124
          %1127 = dma.vmem_to_hbm [thread:$0]  %s1125, 128, %s1122, %s1095
        $region52: #{tpu_custom_call.1} parent=35 // pred_fallthru
          _
      $region36: #{tpu_custom_call.1} parent=5 // pred_fallthru
        _
      %p1128 = scmp.le.s32.totalorder 2, %s22
      // Predicated region
      $region53: #{tpu_custom_call.1} parent=5 // pred_check
        %p1129 = pneg %p1128
      $region54: #{tpu_custom_call.1} parent=5 // pred_check_branch
        %1131 = sbr.rel (%p1129) target = $region56
      $region55: #{tpu_custom_call.1} parent=5 // pred_region
        %s1132 = ssub.s32 %s22, 2
        // Predicated region
        $region57: #{tpu_custom_call.1} parent=55 // pred_check
          %p1133 = pneg %p140
        $region58: #{tpu_custom_call.1} parent=55 // pred_check_branch
          %1135 = sbr.rel (%p1133) target = $region60
        $region59: #{tpu_custom_call.1} parent=55 // pred_region
          %s1136 = sand.u32 %s125, 1
          %s1137 = scalar_lea.sflag [#allocation4], %s1136
          %s1138 = sand.u32 %s125, 1
          %s1139 = smul.addr %s1138, 128
          %s1140 = scalar_lea.vmem [#allocation7], %s1139
          %1141 = dma.done %s1137, 2048
        $region60: #{tpu_custom_call.1} parent=55 // pred_fallthru
          _
        // Predicated region
        $region61: #{tpu_custom_call.1} parent=55 // pred_check
          %p1142 = pneg %p166
        $region62: #{tpu_custom_call.1} parent=55 // pred_check_branch
          %1144 = sbr.rel (%p1142) target = $region64
        $region63: #{tpu_custom_call.1} parent=55 // pred_region
          %s1145 = sand.u32 %s151, 1
          %s1146 = scalar_lea.sflag [#allocation9], %s1145
          %s1147 = sand.u32 %s151, 1
          %s1148 = smul.addr %s1147, 8
          %s1149 = scalar_lea.vmem [#allocation8], %s1148
          %1150 = dma.done %s1146, 128
        $region64: #{tpu_custom_call.1} parent=55 // pred_fallthru
          _
      $region56: #{tpu_custom_call.1} parent=5 // pred_fallthru
        _
    $region6: #{tpu_custom_call.1} parent=1 // loop_footer
      %s26 = sadd.s32 1, %s22
    $region7: #{tpu_custom_call.1} parent=1 // loop_footer_branch
      %21 = sbr.rel target = $region3
    $region8: #{tpu_custom_call.1} parent=1 // loop_exit
      _
    %1151 = vsyncpa [#allocation3], 1
    %s1152 = scalar_lea.sflag [#allocation3], 1
    %1153 = vsyncpa %s1152, 1
    %1154 = vsyncpa [#allocation6], 1
    %1155 = vsyncpa [#allocation4], 1
    %s1156 = scalar_lea.sflag [#allocation4], 1
    %1157 = vsyncpa %s1156, 1
    %1158 = vsyncpa [#allocation9], 1
    %s1159 = scalar_lea.sflag [#allocation9], 1
    %1160 = vsyncpa %s1159, 1

</llo_original>
